<compile_context>
chip_gen: v5e
topology: v5e:2x2
jax: 0.10.0
libtpu: 0.0.40
codegen_flags: <defaults>
</compile_context>

<pallas_src>
import functools

import jax
import jax.numpy as jnp
from jax.experimental import pallas as pl
from jax.experimental.pallas import tpu as pltpu

_SUBLANE = 8
# Per-block byte budget for one x tile.  Double-buffered input + double-
# buffered output => ~4x this resident in VMEM, well under every chip's
# scoped limit (16/32/32 MiB on v5e/v6e/v7x).
_TILE_BYTES_BUDGET = 6 * 1024 * 1024
_VMEM_LIMIT_BYTES = 32 * 1024 * 1024


def _choose_row_tile(n, d, itemsize):
    """Largest N-tile (multiple of 8, <= n) that fits the VMEM budget."""
    if n <= _SUBLANE:
        return n
    max_rows = max(_SUBLANE, _TILE_BYTES_BUDGET // max(1, d * itemsize))
    tn = min(n, max_rows, 1024)
    tn = max(_SUBLANE, (tn // _SUBLANE) * _SUBLANE)
    return tn


# ----------------------------------------------------------------------------
# Kernel 1: data-dependent initialization (first forward call)
#   trans = -mean(value, axis=0)                      (1, D)
#   scale = 1 / (std(value, axis=0, ddof=1) + 1e-6)   (1, D)   (torch.std)
# Streaming single-pass sum / sum^2 reduction over N-tiles, f32 accumulators.
# ----------------------------------------------------------------------------
def _init_kernel(x_ref, trans_ref, scale_ref, sum_ref, sumsq_ref, *, n_total, tn):
    i = pl.program_id(0)

    @pl.when(i == 0)
    def _():
        sum_ref[...] = jnp.zeros_like(sum_ref)
        sumsq_ref[...] = jnp.zeros_like(sumsq_ref)

    x = x_ref[...].astype(jnp.float32)                         # (TN, D)
    # Mask padded rows of a ragged last tile out of the reduction.
    row = jax.lax.broadcasted_iota(jnp.int32, x.shape, 0) + i * tn
    x = jnp.where(row < n_total, x, 0.0)
    sum_ref[...] += jnp.sum(x, axis=0, keepdims=True)
    sumsq_ref[...] += jnp.sum(x * x, axis=0, keepdims=True)

    @pl.when(i == pl.num_programs(0) - 1)
    def _():
        n = jnp.float32(n_total)
        mu = sum_ref[...] / n
        # Unbiased variance (ddof=1), matching torch.std.  NOTE: n_total == 1
        # yields inf/NaN here exactly like the PyTorch reference would.
        var = (sumsq_ref[...] - n * mu * mu) / (n - 1.0)
        sig = jnp.sqrt(jnp.maximum(var, 0.0))
        trans_ref[...] = -mu
        scale_ref[...] = 1.0 / (sig + 1e-6)


def norm_init(x):
    n, d = x.shape
    tn = _choose_row_tile(n, d, x.dtype.itemsize)
    grid = (pl.cdiv(n, tn),)
    kernel = functools.partial(_init_kernel, n_total=n, tn=tn)
    return pl.pallas_call(
        kernel,
        out_shape=(
            jax.ShapeDtypeStruct((1, d), jnp.float32),
            jax.ShapeDtypeStruct((1, d), jnp.float32),
        ),
        grid_spec=pltpu.PrefetchScalarGridSpec(
            num_scalar_prefetch=0,
            grid=grid,
            in_specs=[pl.BlockSpec((tn, d), lambda i: (i, 0))],
            out_specs=(
                pl.BlockSpec((1, d), lambda i: (0, 0)),   # resident across grid
                pl.BlockSpec((1, d), lambda i: (0, 0)),
            ),
            scratch_shapes=[
                pltpu.VMEM((1, d), jnp.float32),          # running sum
                pltpu.VMEM((1, d), jnp.float32),          # running sum of squares
            ],
        ),
        compiler_params=pltpu.CompilerParams(
            dimension_semantics=("arbitrary",),           # reduction axis
            vmem_limit_bytes=_VMEM_LIMIT_BYTES,
        ),
    )(x)


# ----------------------------------------------------------------------------
# Kernel 2: forward affine transform  out = scale * (value + trans)
# (log_det handled separately — no lane-width-1 output here.)
# ----------------------------------------------------------------------------
def _fwd_kernel(x_ref, trans_ref, scale_ref, out_ref):
    x = x_ref[...].astype(jnp.float32)
    out_ref[...] = (scale_ref[...] * (x + trans_ref[...])).astype(out_ref.dtype)


# Tiny kernel: log_det scalar = sum(log|scale|) over the (1, D) parameter.
def _logdet_kernel(scale_ref, ld_ref):
    s = scale_ref[...].astype(jnp.float32)
    ld_ref[...] = jnp.sum(jnp.log(jnp.abs(s)), axis=(0, 1), keepdims=True)


def norm_logdet(scale):
    d = scale.shape[1]
    return pl.pallas_call(
        _logdet_kernel,
        out_shape=jax.ShapeDtypeStruct((1, 1), jnp.float32),
        in_specs=[pl.BlockSpec((1, d), lambda: (0, 0))],
        out_specs=pl.BlockSpec((1, 1), lambda: (0, 0)),
    )(scale)


def norm_forward(x, trans, scale):
    n, d = x.shape
    tn = _choose_row_tile(n, d, x.dtype.itemsize)
    grid = (pl.cdiv(n, tn),)
    out = pl.pallas_call(
        _fwd_kernel,
        out_shape=jax.ShapeDtypeStruct((n, d), x.dtype),
        grid_spec=pltpu.PrefetchScalarGridSpec(
            num_scalar_prefetch=0,
            grid=grid,
            in_specs=[
                pl.BlockSpec((tn, d), lambda i: (i, 0)),
                pl.BlockSpec((1, d), lambda i: (0, 0)),   # params stay resident
                pl.BlockSpec((1, d), lambda i: (0, 0)),
            ],
            out_specs=pl.BlockSpec((tn, d), lambda i: (i, 0)),
        ),
        compiler_params=pltpu.CompilerParams(
            dimension_semantics=("parallel",),            # shard rows over TCs (v7x)
            vmem_limit_bytes=_VMEM_LIMIT_BYTES,
        ),
    )(x, trans, scale)
    ld = norm_logdet(scale)                               # (1, 1) scalar, once
    log_det = jnp.full((n,), ld[0, 0], dtype=jnp.float32)  # broadcast is free
    return out, log_det


# ----------------------------------------------------------------------------
# Kernel 3: inverse path  value * (1/scale) - trans
# (reciprocal computed once per (1, D) tile, reused across all rows)
# ----------------------------------------------------------------------------
def _inv_kernel(x_ref, trans_ref, scale_ref, out_ref):
    # approx=False keeps the round-trip exact; approx=True (EUP) is fine when
    # looser tolerance is acceptable.
    inv_scale = pl.reciprocal(scale_ref[...], approx=False)      # (1, D)
    x = x_ref[...].astype(jnp.float32)
    out_ref[...] = (x * inv_scale - trans_ref[...]).astype(out_ref.dtype)


def norm_inverse(x, trans, scale):
    n, d = x.shape
    tn = _choose_row_tile(n, d, x.dtype.itemsize)
    grid = (pl.cdiv(n, tn),)
    return pl.pallas_call(
        _inv_kernel,
        out_shape=jax.ShapeDtypeStruct((n, d), x.dtype),
        grid_spec=pltpu.PrefetchScalarGridSpec(
            num_scalar_prefetch=0,
            grid=grid,
            in_specs=[
                pl.BlockSpec((tn, d), lambda i: (i, 0)),
                pl.BlockSpec((1, d), lambda i: (0, 0)),
                pl.BlockSpec((1, d), lambda i: (0, 0)),
            ],
            out_specs=pl.BlockSpec((tn, d), lambda i: (i, 0)),
        ),
        compiler_params=pltpu.CompilerParams(
            dimension_semantics=("parallel",),
            vmem_limit_bytes=_VMEM_LIMIT_BYTES,
        ),
    )(x, trans, scale)


# ----------------------------------------------------------------------------
# Thin stateful wrapper mirroring the PyTorch module's behavior.
# ----------------------------------------------------------------------------
class NormPallas:
    def __init__(self, num_elements):
        self.nm = num_elements
        # deterministic parameter init, identical to nn.Parameter(zeros / ones)
        self.trans = jnp.zeros((1, num_elements), jnp.float32)
        self.scale = jnp.ones((1, num_elements), jnp.float32)
        self.is_initialized = False
        self.log_det = None

    def __call__(self, value, is_forward=True):
        if not self.is_initialized:
            trans, scale = norm_init(value)
            self.trans, self.scale = trans, scale
            self.is_initialized = True
        if is_forward:
            out, log_det = norm_forward(value, self.trans, self.scale)
            self.log_det = log_det
            return out
        else:
            return norm_inverse(value, self.trans, self.scale)

    def inverse(self, value):
        return self(value, is_forward=False)


if __name__ == "__main__":
    num_elements = 32      # hidden dim D (small demo; use multiples of 128 for prod)
    batch = 8              # N

    key = jax.random.PRNGKey(0)
    x = jax.random.normal(key, (batch, num_elements), dtype=jnp.float32)

    norm = NormPallas(num_elements)
    y = norm(x)                       # forward (data-dependent init happens here)
    log_det = norm.log_det
    x_rec = norm.inverse(y)           # inverse round-trip

    jax.block_until_ready((y, log_det, x_rec))

    # pure-JAX reference check (torch.std is unbiased, ddof=1)
    mu_ref = jnp.mean(x, axis=0, keepdims=True)
    sig_ref = jnp.std(x, axis=0, keepdims=True, ddof=1)
    trans_ref = -mu_ref
    scale_ref = 1.0 / (sig_ref + 1e-6)
    y_ref = scale_ref * (x + trans_ref)
    ld_ref = jnp.ones((batch,)) * jnp.sum(jnp.log(jnp.abs(scale_ref)))

    assert y.shape == (batch, num_elements) and log_det.shape == (batch,)
    assert jnp.allclose(y, y_ref, rtol=1e-5, atol=1e-5), "forward mismatch"
    assert jnp.allclose(log_det, ld_ref, rtol=1e-5, atol=1e-5), "log_det mismatch"
    assert jnp.allclose(x_rec, x, rtol=1e-5, atol=1e-5), "inverse round-trip mismatch"

    print("KERNEL_OK")
</pallas_src>

<mosaic_0001>
module attributes {stable_mosaic.version = 11 : i64} {
  func.func @_init_kernel(%arg0: i32, %arg1: memref<8x32xf32, #tpu.memory_space<vmem>>, %arg2: memref<1x32xf32, #tpu.memory_space<vmem>>, %arg3: memref<1x32xf32, #tpu.memory_space<vmem>>, %arg4: memref<1x32xf32, #tpu.memory_space<vmem>>, %arg5: memref<1x32xf32, #tpu.memory_space<vmem>>) attributes {dimension_semantics = [#tpu.dimension_semantics<arbitrary>], iteration_bounds = array<i64: 1>, scalar_prefetch = 0 : i64, scratch_operands = 2 : i64, tpu.core_type = #tpu.core_type<tc>, window_params = [{transform_indices = @transform_0, window_bounds = array<i64: 8, 32>}, {pipeline_mode = #tpu.pipeline_mode<synchronous>, transform_indices = @transform_1, window_bounds = array<i64: 1, 32>}, {pipeline_mode = #tpu.pipeline_mode<synchronous>, transform_indices = @transform_2, window_bounds = array<i64: 1, 32>}]} {
    %c0_i32 = arith.constant 0 : i32
    %0 = arith.cmpi eq, %arg0, %c0_i32 : i32
    %1 = arith.extui %0 : i1 to i32
    %c0_i32_0 = arith.constant 0 : i32
    %2 = arith.cmpi ne, %1, %c0_i32_0 : i32
    scf.if %2 {
      %cst_15 = arith.constant 0.000000e+00 : f32
      %26 = vector.broadcast %cst_15 : f32 to vector<1x32xf32>
      %c0_16 = arith.constant 0 : index
      %c0_17 = arith.constant 0 : index
      %27 = vector.load %arg4[%c0_16, %c0_17] : memref<1x32xf32, #tpu.memory_space<vmem>>, vector<1x32xf32>
      tpu.vector_store %arg4[%c0_16, %c0_17], %26 {strides = array<i32>} : memref<1x32xf32, #tpu.memory_space<vmem>>, vector<1x32xf32>,
      %cst_18 = arith.constant 0.000000e+00 : f32
      %28 = vector.broadcast %cst_18 : f32 to vector<1x32xf32>
      %c0_19 = arith.constant 0 : index
      %c0_20 = arith.constant 0 : index
      %29 = vector.load %arg5[%c0_19, %c0_20] : memref<1x32xf32, #tpu.memory_space<vmem>>, vector<1x32xf32>
      tpu.vector_store %arg5[%c0_19, %c0_20], %28 {strides = array<i32>} : memref<1x32xf32, #tpu.memory_space<vmem>>, vector<1x32xf32>,
    } else {
    }
    %c0 = arith.constant 0 : index
    %c0_1 = arith.constant 0 : index
    %3 = vector.load %arg1[%c0, %c0_1] : memref<8x32xf32, #tpu.memory_space<vmem>>, vector<8x32xf32>
    %4 = tpu.iota {dimensions = array<i32: 0>} : vector<8x32xi32>
    %c8_i32 = arith.constant 8 : i32
    %5 = arith.muli %arg0, %c8_i32 : i32
    %6 = vector.broadcast %5 : i32 to vector<8x32xi32>
    %7 = arith.addi %4, %6 : vector<8x32xi32>
    %c8_i32_2 = arith.constant 8 : i32
    %8 = vector.broadcast %c8_i32_2 : i32 to vector<8x32xi32>
    %9 = arith.cmpi slt, %7, %8 : vector<8x32xi32>
    %cst = arith.constant 0.000000e+00 : f32
    %10 = vector.broadcast %cst : f32 to vector<8x32xf32>
    %11 = arith.select %9, %3, %10 : vector<8x32xi1>, vector<8x32xf32>
    %c0_3 = arith.constant 0 : index
    %c0_4 = arith.constant 0 : index
    %12 = vector.load %arg4[%c0_3, %c0_4] : memref<1x32xf32, #tpu.memory_space<vmem>>, vector<1x32xf32>
    %cst_5 = arith.constant dense<0.000000e+00> : vector<32xf32>
    %13 = vector.multi_reduction <add>, %11, %cst_5 [0] : vector<8x32xf32> to vector<32xf32>
    %14 = vector.shape_cast %13 : vector<32xf32> to vector<1x32xf32>
    %15 = arith.addf %12, %14 : vector<1x32xf32>
    %c0_6 = arith.constant 0 : index
    %c0_7 = arith.constant 0 : index
    %16 = vector.load %arg4[%c0_6, %c0_7] : memref<1x32xf32, #tpu.memory_space<vmem>>, vector<1x32xf32>
    tpu.vector_store %arg4[%c0_6, %c0_7], %15 {strides = array<i32>} : memref<1x32xf32, #tpu.memory_space<vmem>>, vector<1x32xf32>,
    %c0_8 = arith.constant 0 : index
    %c0_9 = arith.constant 0 : index
    %17 = vector.load %arg5[%c0_8, %c0_9] : memref<1x32xf32, #tpu.memory_space<vmem>>, vector<1x32xf32>
    %18 = arith.mulf %11, %11 : vector<8x32xf32>
    %cst_10 = arith.constant dense<0.000000e+00> : vector<32xf32>
    %19 = vector.multi_reduction <add>, %18, %cst_10 [0] : vector<8x32xf32> to vector<32xf32>
    %20 = vector.shape_cast %19 : vector<32xf32> to vector<1x32xf32>
    %21 = arith.addf %17, %20 : vector<1x32xf32>
    %c0_11 = arith.constant 0 : index
    %c0_12 = arith.constant 0 : index
    %22 = vector.load %arg5[%c0_11, %c0_12] : memref<1x32xf32, #tpu.memory_space<vmem>>, vector<1x32xf32>
    tpu.vector_store %arg5[%c0_11, %c0_12], %21 {strides = array<i32>} : memref<1x32xf32, #tpu.memory_space<vmem>>, vector<1x32xf32>,
    %c0_i32_13 = arith.constant 0 : i32
    %23 = arith.cmpi eq, %arg0, %c0_i32_13 : i32
    %24 = arith.extui %23 : i1 to i32
    %c0_i32_14 = arith.constant 0 : i32
    %25 = arith.cmpi ne, %24, %c0_i32_14 : i32
    scf.if %25 {
      %c0_15 = arith.constant 0 : index
      %c0_16 = arith.constant 0 : index
      %26 = vector.load %arg4[%c0_15, %c0_16] : memref<1x32xf32, #tpu.memory_space<vmem>>, vector<1x32xf32>
      %cst_17 = arith.constant 8.000000e+00 : f32
      %27 = vector.broadcast %cst_17 : f32 to vector<1x32xf32>
      %28 = arith.divf %26, %27 : vector<1x32xf32>
      %c0_18 = arith.constant 0 : index
      %c0_19 = arith.constant 0 : index
      %29 = vector.load %arg5[%c0_18, %c0_19] : memref<1x32xf32, #tpu.memory_space<vmem>>, vector<1x32xf32>
      %cst_20 = arith.constant 8.000000e+00 : f32
      %30 = vector.broadcast %cst_20 : f32 to vector<1x32xf32>
      %31 = arith.mulf %30, %28 : vector<1x32xf32>
      %32 = arith.mulf %31, %28 : vector<1x32xf32>
      %33 = arith.subf %29, %32 : vector<1x32xf32>
      %cst_21 = arith.constant 8.000000e+00 : f32
      %cst_22 = arith.constant 1.000000e+00 : f32
      %34 = arith.subf %cst_21, %cst_22 : f32
      %35 = vector.broadcast %34 : f32 to vector<1x32xf32>
      %36 = arith.divf %33, %35 : vector<1x32xf32>
      %cst_23 = arith.constant 0.000000e+00 : f32
      %37 = vector.broadcast %cst_23 : f32 to vector<1x32xf32>
      %38 = arith.maximumf %36, %37 : vector<1x32xf32>
      %39 = math.sqrt %38 : vector<1x32xf32>
      %cst_24 = arith.constant 0.000000e+00 : f32
      %40 = vector.broadcast %cst_24 : f32 to vector<1x32xf32>
      %41 = arith.subf %40, %28 : vector<1x32xf32>
      %c0_25 = arith.constant 0 : index
      %c0_26 = arith.constant 0 : index
      %42 = vector.load %arg2[%c0_25, %c0_26] : memref<1x32xf32, #tpu.memory_space<vmem>>, vector<1x32xf32>
      tpu.vector_store %arg2[%c0_25, %c0_26], %41 {strides = array<i32>} : memref<1x32xf32, #tpu.memory_space<vmem>>, vector<1x32xf32>,
      %cst_27 = arith.constant 9.99999997E-7 : f32
      %43 = vector.broadcast %cst_27 : f32 to vector<1x32xf32>
      %44 = arith.addf %39, %43 : vector<1x32xf32>
      %cst_28 = arith.constant 1.000000e+00 : f32
      %45 = vector.broadcast %cst_28 : f32 to vector<1x32xf32>
      %46 = arith.divf %45, %44 : vector<1x32xf32>
      %c0_29 = arith.constant 0 : index
      %c0_30 = arith.constant 0 : index
      %47 = vector.load %arg3[%c0_29, %c0_30] : memref<1x32xf32, #tpu.memory_space<vmem>>, vector<1x32xf32>
      tpu.vector_store %arg3[%c0_29, %c0_30], %46 {strides = array<i32>} : memref<1x32xf32, #tpu.memory_space<vmem>>, vector<1x32xf32>,
    } else {
    }
    return
  }
  func.func @transform_0(%arg0: i32) -> (i32, i32) {
    %c0_i32 = arith.constant 0 : i32
    %c0_i32_0 = arith.constant 0 : i32
    return %arg0, %c0_i32 : i32, i32
  }
  func.func @transform_1(%arg0: i32) -> (i32, i32) {
    %c0_i32 = arith.constant 0 : i32
    %c0_i32_0 = arith.constant 0 : i32
    %c0_i32_1 = arith.constant 0 : i32
    return %c0_i32, %c0_i32_0 : i32, i32
  }
  func.func @transform_2(%arg0: i32) -> (i32, i32) {
    %c0_i32 = arith.constant 0 : i32
    %c0_i32_0 = arith.constant 0 : i32
    %c0_i32_1 = arith.constant 0 : i32
    return %c0_i32, %c0_i32_0 : i32, i32
  }
}

</mosaic_0001>

<llo_original>
// kernel: tpu_custom_call.1
$region0: #{tpu_custom_call.1}
  #allocation0 [shape = 'u32[]', space=smem, size = 0x4, offset = 0x4, fixed_abs, tag = 'smem constant byte address 0x4 - core index']
  #allocation1 [shape = 'u32[72,128]{1,0:T(1,128)}', space=vmem, size = 0x9000, scoped, tag = 'internal scratch']
  #allocation2 [shape = 'f32[1,32]{1,0:T(1,128)}', space=vmem, size = 0x200, scoped, tag = 'scratch operand']
  #allocation3 [shape = 'f32[1,32]{1,0:T(1,128)}', space=vmem, size = 0x200, scoped, tag = 'scratch operand']
  %s0 = inlined_call_operand.hbm [shape: f32[8,32], index: 0, kind: input, shape index: {}]
  %s1 = inlined_call_operand.hbm [shape: f32[1,32], index: 1, kind: output, shape index: {0}]
  %s2 = inlined_call_operand.hbm [shape: f32[1,32], index: 2, kind: output, shape index: {1}]
  %3 = xla_tuple %s1, %s2
  %s4 = sld [smem:[#allocation0]]
  $region34: #{tpu_custom_call.1} parent=0
    _
  %s6 = ssub.s32 1, %s4
  %s7 = scalar_select 0, %s6, %s4
  $region1: #{tpu_custom_call.1} parent=0
    #allocation4 [shape = 'u8[4096]{0}', space=vmem, size = 0x1000, scoped, tag = 'input window, operand 0, single buffered']
    #allocation5 [shape = 's32[1]{0}', space=sflag, size = 0x4, scoped, tag = 'scoped memory for tpu_custom_call.1']
    #allocation6 [shape = 's32[1]{0}', space=sflag, size = 0x4, scoped, tag = 'scoped memory for tpu_custom_call.1']
    #allocation7 [shape = 'u8[512]{0}', space=vmem, size = 0x400, scoped, tag = 'output window, operand 0, single buffered']
    #allocation8 [shape = 'u8[512]{0}', space=vmem, size = 0x400, scoped, tag = 'output window, operand 1, single buffered']
    #allocation9 [shape = 's32[1]{0}', space=sflag, size = 0x4, scoped, tag = 'scoped memory for tpu_custom_call.1']
    %8 = vsyncpa [#allocation5], 0
    %9 = vsyncpa [#allocation6], 0
    %10 = vsyncpa [#allocation9], 0
    // Predicated region
    $region2: #{tpu_custom_call.1} parent=1 // pred_check
      _
    $region3: #{tpu_custom_call.1} parent=1 // pred_check_branch
      %12 = sbr.rel (0) target = $region5
    $region4: #{tpu_custom_call.1} parent=1 // pred_region
      %14 = vsyncadd [#allocation5], 0
      %s16 = sshll.u32 %s0, 4
      %s17 = int_to_ptr.hbm [resolvable:$true] %s16
      %s18 = sshll.u32 [#allocation4], 4
      %s19 = int_to_ptr.vmem [resolvable:$true] %s18
      %21 = dma.hbm_to_vmem [thread:$0]  %s17, 128, %s19, [#allocation5]
    $region5: #{tpu_custom_call.1} parent=1 // pred_fallthru
      _
    // Predicated region
    $region6: #{tpu_custom_call.1} parent=1 // pred_check
      _
    $region7: #{tpu_custom_call.1} parent=1 // pred_check_branch
      %23 = sbr.rel (0) target = $region9
    $region8: #{tpu_custom_call.1} parent=1 // pred_region
      %25 = dma.done [#allocation5], 128
    $region9: #{tpu_custom_call.1} parent=1 // pred_fallthru
      _
    %p26 = scmp.eq.s32.totalorder 0, 0
    // Predicated region
    $region10: #{tpu_custom_call.1} parent=1 // pred_check
      %p27 = pneg %p26
    $region11: #{tpu_custom_call.1} parent=1 // pred_check_branch
      %29 = sbr.rel (%p27) target = $region13
    $region12: #{tpu_custom_call.1} parent=1 // pred_region
      %vm30 = vcmask 253952
      %31 = vst.msk [vmem:[#allocation2] sm:$0x1] %vm30, 0.0
      %32 = vst.msk [vmem:[#allocation3] sm:$0x1] %vm30, 0.0
    $region13: #{tpu_custom_call.1} parent=1 // pred_fallthru
      _
    %v33 = vld [vmem:[#allocation4] sm:$0xff]
    %v34 = vlaneseq
    %v35 = vshrl.u32 %v34, 7
    %s36 = smul.u32 0, 8
    %v37 = vstv %s36
    %v38 = vadd.s32 %v35, %v37
    %vm39 = vcmp.lt.s32.totalorder %v38, 8
    %v40 = vsel %vm39, %v33, 0.0
    %v41 = vld [vmem:[#allocation2] sm:$0x1]
    %vm42 = vcmask 261120
    %v43 = vsel %vm42, %v40, 0.0
    %v44 = vrot.slane %v43, 4
    %v45 = vadd.f32 %v43, %v44
    %v46 = vrot.slane %v45, 2
    %v47 = vadd.f32 %v45, %v46
    %v48 = vrot.slane %v47, 1
    %v49 = vadd.f32 %v47, %v48
    %v50 = vadd.f32 %v41, %v49
    %vm51 = vcmask 253952
    %52 = vst.msk [vmem:[#allocation2] sm:$0x1] %vm51, %v50
    %v53 = vld [vmem:[#allocation3] sm:$0x1]
    %v54 = vmul.f32 %v40, %v40
    %v55 = vsel %vm42, %v54, 0.0
    %v56 = vrot.slane %v55, 4
    %v57 = vadd.f32 %v55, %v56
    %v58 = vrot.slane %v57, 2
    %v59 = vadd.f32 %v57, %v58
    %v60 = vrot.slane %v59, 1
    %v61 = vadd.f32 %v59, %v60
    %v62 = vadd.f32 %v53, %v61
    %63 = vst.msk [vmem:[#allocation3] sm:$0x1] %vm51, %v62
    // Predicated region
    $region14: #{tpu_custom_call.1} parent=1 // pred_check
      %p64 = pneg %p26
    $region15: #{tpu_custom_call.1} parent=1 // pred_check_branch
      %66 = sbr.rel (%p64) target = $region17
    $region16: #{tpu_custom_call.1} parent=1 // pred_region
      %v67 = vld [vmem:[#allocation2] sm:$0x1]
      %v68 = vrcp.pop 8.0
      %v69 = vmul.f32 8.0, %v68
      %v70 = vsub.f32 1.0, %v69
      %v71 = vmul.f32 %v68, %v70
      %v72 = vadd.f32 %v68, %v71
      %vm73 = vweird.f32 %v68
      %v74 = vsel %vm73, %v68, %v72
      %v75 = vmul.f32 %v67, %v74
      %v76 = vld [vmem:[#allocation3] sm:$0x1]
      %v77 = vmul.f32 %v75, 8.0
      %v78 = vmul.f32 %v77, %v75
      %v79 = vsub.f32 %v76, %v78
      %v80 = vrcp.pop 7.0
      %v81 = vmul.f32 7.0, %v80
      %v82 = vsub.f32 1.0, %v81
      %v83 = vmul.f32 %v80, %v82
      %v84 = vadd.f32 %v80, %v83
      %vm85 = vweird.f32 %v80
      %v86 = vsel %vm85, %v80, %v84
      %v87 = vmul.f32 %v79, %v86
      %v88 = vmax.f32 %v87, 0.0
      %v89 = vrsqrt.pop %v88
      %v90 = vmul.f32 %v89, %v88
      %v91 = vmul.f32 %v90, %v89
      %v92 = vmul.f32 0.5, %v91
      %v93 = vsub.f32 1.5, %v92
      %v94 = vmul.f32 %v89, %v93
      %v95 = vmul.f32 %v88, %v94
      %vm96 = vcmp.eq.f32.partialorder %v88, inf
      %v97 = vsel %vm96, %v88, %v95
      %vm98 = vcmp.eq.f32.partialorder %v88, 0.0
      %v99 = vand.u32 %v88, 2147483648
      %v100 = vsel %vm98, %v99, %v97
      %v101 = vsub.f32 0.0, %v75
      %102 = vst.msk [vmem:[#allocation7] sm:$0x1] %vm51, %v101
      %v103 = vadd.f32 %v100, 1e-06
      %v104 = vrcp.pop %v103
      %v105 = vmul.f32 %v103, %v104
      %v106 = vsub.f32 1.0, %v105
      %v107 = vmul.f32 %v104, %v106
      %v108 = vadd.f32 %v104, %v107
      %vm109 = vweird.f32 %v103
      %vm110 = vweird.f32 %v104
      %vm111 = vmor %vm109, %vm110
      %v112 = vsel %vm111, %v104, %v108
      %v113 = vand.u32 2147483647, %v103
      %vm114 = vcmp.eq.f32.partialorder %v113, 8.507059e+37
      %v115 = vand.u32 %v103, 2147483648
      %v116 = vor.u32 1.1754944e-38, %v115
      %v117 = vsel %vm114, %v116, %v112
      %v118 = vmul.f32 1.0, %v117
      %119 = vst.msk [vmem:[#allocation8] sm:$0x1] %vm51, %v118
    $region17: #{tpu_custom_call.1} parent=1 // pred_fallthru
      _
    // Predicated region
    $region18: #{tpu_custom_call.1} parent=1 // pred_check
      _
    $region19: #{tpu_custom_call.1} parent=1 // pred_check_branch
      %121 = sbr.rel (0) target = $region21
    $region20: #{tpu_custom_call.1} parent=1 // pred_region
      %123 = vsyncadd [#allocation6], 0
      %s125 = sshll.u32 [#allocation7], 4
      %s126 = int_to_ptr.vmem [resolvable:$true] %s125
      %s127 = sshll.u32 %s1, 4
      %s128 = int_to_ptr.hbm [resolvable:$true] %s127
      %130 = dma.vmem_to_hbm [thread:$0]  %s126, 16, %s128, [#allocation6]
    $region21: #{tpu_custom_call.1} parent=1 // pred_fallthru
      _
    // Predicated region
    $region22: #{tpu_custom_call.1} parent=1 // pred_check
      _
    $region23: #{tpu_custom_call.1} parent=1 // pred_check_branch
      %132 = sbr.rel (0) target = $region25
    $region24: #{tpu_custom_call.1} parent=1 // pred_region
      %134 = vsyncadd [#allocation9], 0
      %s136 = sshll.u32 [#allocation8], 4
      %s137 = int_to_ptr.vmem [resolvable:$true] %s136
      %s138 = sshll.u32 %s2, 4
      %s139 = int_to_ptr.hbm [resolvable:$true] %s138
      %141 = dma.vmem_to_hbm [thread:$0]  %s137, 16, %s139, [#allocation9]
    $region25: #{tpu_custom_call.1} parent=1 // pred_fallthru
      _
    // Predicated region
    $region26: #{tpu_custom_call.1} parent=1 // pred_check
      _
    $region27: #{tpu_custom_call.1} parent=1 // pred_check_branch
      %143 = sbr.rel (0) target = $region29
    $region28: #{tpu_custom_call.1} parent=1 // pred_region
      %145 = dma.done [#allocation6], 16
    $region29: #{tpu_custom_call.1} parent=1 // pred_fallthru
      _
    // Predicated region
    $region30: #{tpu_custom_call.1} parent=1 // pred_check
      _
    $region31: #{tpu_custom_call.1} parent=1 // pred_check_branch
      %147 = sbr.rel (0) target = $region33
    $region32: #{tpu_custom_call.1} parent=1 // pred_region
      %149 = dma.done [#allocation9], 16
    $region33: #{tpu_custom_call.1} parent=1 // pred_fallthru
      _
    %150 = vsyncpa [#allocation5], 1
    %151 = vsyncpa [#allocation6], 1
    %152 = vsyncpa [#allocation9], 1

</llo_original>
